<compile_context>
chip_gen: v7x
topology: tpu7x:2x2x1
jax: 0.10.0
libtpu: 0.0.40
codegen_flags: <defaults>
</compile_context>

<pallas_src>
import functools

import jax
import jax.numpy as jnp
from jax.experimental import pallas as pl
from jax.experimental.pallas import tpu as pltpu

_LANES = 128
# 2 input streams x 2 pipeline buffers x 4096 rows x 128 lanes x 4 B = 8 MiB VMEM.
# Safe under v5e's 16 MiB scoped-VMEM default; raise on v6e/v7x (with vmem_limit_bytes)
# if per-step overhead ever shows up in profiles.
_MAX_TILE_ROWS = 4096


def _round_up(x: int, m: int) -> int:
    return (x + m - 1) // m * m


def _sublane_align(dtype) -> int:
    # dtype-dependent sublane packing: f32 -> 8, bf16 -> 16, int8/fp8 -> 32.
    return {4: 8, 2: 16, 1: 32}.get(jnp.dtype(dtype).itemsize, 8)


def _net_kernel(ti_ref, tj_ref, w_ref, out_ref, acc_i, acc_j,
                *, T, tile_rows, tiles_per_half):
    # ti_ref/tj_ref: (tile_rows, D) native dtype; w_ref: (1, D) f32.
    # out_ref: (2, 8, 128) f32 (leading half-axis squeezed by BlockSpec).
    # acc_i/acc_j: (8, D) f32 scratch, persist across the row (reduction) axis.
    t = pl.program_id(1)

    @pl.when(t == 0)
    def _():
        # Must re-init per half: scratch persists across grid steps on a core.
        acc_i[...] = jnp.zeros_like(acc_i)
        acc_j[...] = jnp.zeros_like(acc_j)

    # Global row indices for this tile (unclamped -> masks tiles past the end of T
    # as well as the ragged tail of the last real tile).
    tile_idx = pl.program_id(0) * tiles_per_half + t
    row = jax.lax.broadcasted_iota(jnp.int32, (tile_rows, 1), 0) + tile_idx * tile_rows
    valid = row < T

    w = w_ref[...]  # (1, D) f32, broadcasts over rows

    def partial_sum(x_ref):
        x = jnp.where(valid, x_ref[...].astype(jnp.float32), 0.0)   # mask OOB rows
        xw = x * w                                                   # (tile_rows, D)
        d = xw.shape[-1]
        # Grouped VPU adds only; defer the XLU reduce to the final step.
        return xw.reshape(tile_rows // 8, 8, d).sum(axis=0)          # (8, D)

    acc_i[...] += partial_sum(ti_ref)
    acc_j[...] += partial_sum(tj_ref)

    @pl.when(t == pl.num_programs(1) - 1)
    def _():
        # One XLU reduce per trajectory per half + single unmasked lane-dense stores.
        out_ref[0] = jnp.full(out_ref.shape[1:], jnp.sum(acc_i[...]), jnp.float32)
        out_ref[1] = jnp.full(out_ref.shape[1:], jnp.sum(acc_j[...]), jnp.float32)


def net_forward(traj_i: jax.Array, traj_j: jax.Array, w: jax.Array) -> jax.Array:
    """Pallas equivalent of Net.forward. Returns logits of shape (2,)."""
    assert traj_i.ndim == 2 and traj_j.ndim == 2
    T, D = traj_i.shape
    assert traj_j.shape == (T, D)
    assert w.shape == (1, D)
    assert D <= _LANES, "feature dim expected to fit within one lane tile"

    align = _sublane_align(traj_i.dtype)
    tile_rows = min(_round_up(T, align), _round_up(_MAX_TILE_ROWS, align))
    total_tiles = pl.cdiv(T, tile_rows)
    # Megacore: split the row-tile range into two halves ("parallel" axis). On v7x each
    # TensorCore streams half of both trajectories; on v5e/v6e this is a no-op.
    tiles_per_half = pl.cdiv(total_tiles, 2)
    last_tile = total_tiles - 1

    kernel = functools.partial(
        _net_kernel, T=T, tile_rows=tile_rows, tiles_per_half=tiles_per_half)

    # Clamp the block index so the DMA never goes out of range; the in-kernel row mask
    # (computed from the unclamped index) zeroes any re-read data.
    def traj_index_map(h, t):
        return (jnp.minimum(h * tiles_per_half + t, last_tile), 0)

    traj_spec = pl.BlockSpec((tile_rows, D), traj_index_map)   # last dim == full D

    out = pl.pallas_call(
        kernel,
        out_shape=jax.ShapeDtypeStruct((2, 2, 8, _LANES), jnp.float32),  # (half, traj, 8, 128)
        grid_spec=pltpu.PrefetchScalarGridSpec(
            num_scalar_prefetch=0,
            grid=(2, tiles_per_half),
            in_specs=[
                traj_spec,                                      # traj_i, streamed as-is
                traj_spec,                                      # traj_j, streamed as-is
                pl.BlockSpec((1, D), lambda h, t: (0, 0)),      # tiny constant weight
            ],
            out_specs=pl.BlockSpec((pl.Squeezed(), 2, 8, _LANES),
                                   lambda h, t: (h, 0, 0, 0)),
            scratch_shapes=[
                pltpu.VMEM((8, D), jnp.float32),                # acc_i
                pltpu.VMEM((8, D), jnp.float32),                # acc_j
            ],
        ),
        compiler_params=pltpu.CompilerParams(
            dimension_semantics=("parallel", "arbitrary")),
    )(traj_i, traj_j, w.astype(jnp.float32))

    # Combine the two per-half partial sums -> (2,) logits.
    return out[:, :, 0, 0].sum(axis=0)


def init_params(key: jax.Array, input_dim: int) -> jax.Array:
    # nn.Linear(input_dim, 1, bias=False): weight shape (1, input_dim),
    # default init U(-1/sqrt(fan_in), 1/sqrt(fan_in)) — reproduced deterministically.
    bound = 1.0 / jnp.sqrt(jnp.float32(input_dim))
    return jax.random.uniform(key, (1, input_dim), jnp.float32, -bound, bound)


if __name__ == "__main__":
    # Default Net(): augmented=False, state_action=False -> input_dim = 3
    INPUT_DIM = 3
    T = 8  # trajectory length

    root = jax.random.PRNGKey(0)
    k_w, k_i, k_j = jax.random.split(root, 3)

    w = init_params(k_w, INPUT_DIM)
    traj_i = jax.random.normal(k_i, (T, INPUT_DIM), jnp.float32)
    traj_j = jax.random.normal(k_j, (T, INPUT_DIM), jnp.float32)

    logits = jax.block_until_ready(net_forward(traj_i, traj_j, w))

    # Pure-JAX reference (same math as the PyTorch module).
    ref = jnp.stack([jnp.sum(traj_i @ w.T), jnp.sum(traj_j @ w.T)])
    assert logits.shape == (2,)
    assert jnp.allclose(logits, ref, atol=1e-5, rtol=1e-5), (logits, ref)

    print("KERNEL_OK")
</pallas_src>

<mosaic_0001>
module attributes {stable_mosaic.version = 11 : i64} {
  func.func @_net_kernel(%arg0: i32, %arg1: i32, %arg2: memref<8x3xf32, #tpu.memory_space<vmem>>, %arg3: memref<8x3xf32, #tpu.memory_space<vmem>>, %arg4: memref<1x3xf32, #tpu.memory_space<vmem>>, %arg5: memref<1x2x8x128xf32, #tpu.memory_space<vmem>>, %arg6: memref<8x3xf32, #tpu.memory_space<vmem>>, %arg7: memref<8x3xf32, #tpu.memory_space<vmem>>) attributes {dimension_semantics = [#tpu.dimension_semantics<parallel>, #tpu.dimension_semantics<arbitrary>], iteration_bounds = array<i64: 2, 1>, scalar_prefetch = 0 : i64, scratch_operands = 2 : i64, tpu.core_type = #tpu.core_type<tc>, window_params = [{transform_indices = @transform_0, window_bounds = array<i64: 8, 3>}, {transform_indices = @transform_1, window_bounds = array<i64: 8, 3>}, {pipeline_mode = #tpu.pipeline_mode<synchronous>, transform_indices = @transform_2, window_bounds = array<i64: 1, 3>}, {transform_indices = @transform_3, window_bounds = array<i64: 1, 2, 8, 128>}]} {
    %c0_i32 = arith.constant 0 : i32
    %0 = arith.cmpi eq, %arg1, %c0_i32 : i32
    %1 = arith.extui %0 : i1 to i32
    %c0_i32_0 = arith.constant 0 : i32
    %2 = arith.cmpi ne, %1, %c0_i32_0 : i32
    scf.if %2 {
      %cst_20 = arith.constant 0.000000e+00 : f32
      %39 = vector.broadcast %cst_20 : f32 to vector<8x3xf32>
      %c0_21 = arith.constant 0 : index
      %c0_22 = arith.constant 0 : index
      %40 = vector.load %arg6[%c0_21, %c0_22] : memref<8x3xf32, #tpu.memory_space<vmem>>, vector<8x3xf32>
      tpu.vector_store %arg6[%c0_21, %c0_22], %39 {strides = array<i32>} : memref<8x3xf32, #tpu.memory_space<vmem>>, vector<8x3xf32>,
      %cst_23 = arith.constant 0.000000e+00 : f32
      %41 = vector.broadcast %cst_23 : f32 to vector<8x3xf32>
      %c0_24 = arith.constant 0 : index
      %c0_25 = arith.constant 0 : index
      %42 = vector.load %arg7[%c0_24, %c0_25] : memref<8x3xf32, #tpu.memory_space<vmem>>, vector<8x3xf32>
      tpu.vector_store %arg7[%c0_24, %c0_25], %41 {strides = array<i32>} : memref<8x3xf32, #tpu.memory_space<vmem>>, vector<8x3xf32>,
    } else {
    }
    %c1_i32 = arith.constant 1 : i32
    %3 = arith.muli %arg0, %c1_i32 : i32
    %4 = arith.addi %3, %arg1 : i32
    %5 = tpu.iota {dimensions = array<i32: 0>} : vector<8x1xi32>
    %c8_i32 = arith.constant 8 : i32
    %6 = arith.muli %4, %c8_i32 : i32
    %7 = vector.broadcast %6 : i32 to vector<8x1xi32>
    %8 = arith.addi %5, %7 : vector<8x1xi32>
    %c8_i32_1 = arith.constant 8 : i32
    %9 = vector.broadcast %c8_i32_1 : i32 to vector<8x1xi32>
    %10 = arith.cmpi slt, %8, %9 : vector<8x1xi32>
    %c0 = arith.constant 0 : index
    %c0_2 = arith.constant 0 : index
    %11 = vector.load %arg4[%c0, %c0_2] : memref<1x3xf32, #tpu.memory_space<vmem>>, vector<1x3xf32>
    %c0_3 = arith.constant 0 : index
    %c0_4 = arith.constant 0 : index
    %12 = vector.load %arg6[%c0_3, %c0_4] : memref<8x3xf32, #tpu.memory_space<vmem>>, vector<8x3xf32>
    %c0_5 = arith.constant 0 : index
    %c0_6 = arith.constant 0 : index
    %13 = vector.load %arg2[%c0_5, %c0_6] : memref<8x3xf32, #tpu.memory_space<vmem>>, vector<8x3xf32>
    %cst = arith.constant 0.000000e+00 : f32
    %14 = vector.shape_cast %10 : vector<8x1xi1> to vector<8x1xi1>
    %15 = vector.broadcast %14 : vector<8x1xi1> to vector<8x3xi1>
    %16 = vector.broadcast %cst : f32 to vector<8x3xf32>
    %17 = arith.select %15, %13, %16 : vector<8x3xi1>, vector<8x3xf32>
    %18 = vector.broadcast %11 : vector<1x3xf32> to vector<8x3xf32>
    %19 = arith.mulf %17, %18 : vector<8x3xf32>
    %20 = vector.shape_cast %19 : vector<8x3xf32> to vector<1x8x3xf32>
    %cst_7 = arith.constant dense<0.000000e+00> : vector<8x3xf32>
    %21 = vector.multi_reduction <add>, %20, %cst_7 [0] : vector<1x8x3xf32> to vector<8x3xf32>
    %22 = arith.addf %12, %21 : vector<8x3xf32>
    %c0_8 = arith.constant 0 : index
    %c0_9 = arith.constant 0 : index
    %23 = vector.load %arg6[%c0_8, %c0_9] : memref<8x3xf32, #tpu.memory_space<vmem>>, vector<8x3xf32>
    tpu.vector_store %arg6[%c0_8, %c0_9], %22 {strides = array<i32>} : memref<8x3xf32, #tpu.memory_space<vmem>>, vector<8x3xf32>,
    %c0_10 = arith.constant 0 : index
    %c0_11 = arith.constant 0 : index
    %24 = vector.load %arg7[%c0_10, %c0_11] : memref<8x3xf32, #tpu.memory_space<vmem>>, vector<8x3xf32>
    %c0_12 = arith.constant 0 : index
    %c0_13 = arith.constant 0 : index
    %25 = vector.load %arg3[%c0_12, %c0_13] : memref<8x3xf32, #tpu.memory_space<vmem>>, vector<8x3xf32>
    %cst_14 = arith.constant 0.000000e+00 : f32
    %26 = vector.shape_cast %10 : vector<8x1xi1> to vector<8x1xi1>
    %27 = vector.broadcast %26 : vector<8x1xi1> to vector<8x3xi1>
    %28 = vector.broadcast %cst_14 : f32 to vector<8x3xf32>
    %29 = arith.select %27, %25, %28 : vector<8x3xi1>, vector<8x3xf32>
    %30 = vector.broadcast %11 : vector<1x3xf32> to vector<8x3xf32>
    %31 = arith.mulf %29, %30 : vector<8x3xf32>
    %32 = vector.shape_cast %31 : vector<8x3xf32> to vector<1x8x3xf32>
    %cst_15 = arith.constant dense<0.000000e+00> : vector<8x3xf32>
    %33 = vector.multi_reduction <add>, %32, %cst_15 [0] : vector<1x8x3xf32> to vector<8x3xf32>
    %34 = arith.addf %24, %33 : vector<8x3xf32>
    %c0_16 = arith.constant 0 : index
    %c0_17 = arith.constant 0 : index
    %35 = vector.load %arg7[%c0_16, %c0_17] : memref<8x3xf32, #tpu.memory_space<vmem>>, vector<8x3xf32>
    tpu.vector_store %arg7[%c0_16, %c0_17], %34 {strides = array<i32>} : memref<8x3xf32, #tpu.memory_space<vmem>>, vector<8x3xf32>,
    %c0_i32_18 = arith.constant 0 : i32
    %36 = arith.cmpi eq, %arg1, %c0_i32_18 : i32
    %37 = arith.extui %36 : i1 to i32
    %c0_i32_19 = arith.constant 0 : i32
    %38 = arith.cmpi ne, %37, %c0_i32_19 : i32
    scf.if %38 {
      %c0_20 = arith.constant 0 : index
      %c0_21 = arith.constant 0 : index
      %39 = vector.load %arg6[%c0_20, %c0_21] : memref<8x3xf32, #tpu.memory_space<vmem>>, vector<8x3xf32>
      %40 = vector.shape_cast %39 : vector<8x3xf32> to vector<1x8x3xf32>
      %cst_22 = arith.constant dense<0.000000e+00> : vector<1xf32>
      %41 = vector.multi_reduction <add>, %40, %cst_22 [1, 2] : vector<1x8x3xf32> to vector<1xf32>
      %42 = vector.shape_cast %41 : vector<1xf32> to vector<1x1x1xf32>
      %43 = vector.extract %42[0, 0, 0] : f32 from vector<1x1x1xf32>
      %44 = vector.broadcast %43 : f32 to vector<8x128xf32>
      %c0_23 = arith.constant 0 : index
      %c0_24 = arith.constant 0 : index
      %c0_25 = arith.constant 0 : index
      %c0_26 = arith.constant 0 : index
      %45 = vector.load %arg5[%c0_23, %c0_24, %c0_25, %c0_26] : memref<1x2x8x128xf32, #tpu.memory_space<vmem>>, vector<1x1x8x128xf32>
      %46 = vector.shape_cast %45 : vector<1x1x8x128xf32> to vector<8x128xf32>
      %47 = vector.shape_cast %44 : vector<8x128xf32> to vector<1x1x8x128xf32>
      tpu.vector_store %arg5[%c0_23, %c0_24, %c0_25, %c0_26], %47 {strides = array<i32>} : memref<1x2x8x128xf32, #tpu.memory_space<vmem>>, vector<1x1x8x128xf32>,
      %c0_27 = arith.constant 0 : index
      %c0_28 = arith.constant 0 : index
      %48 = vector.load %arg7[%c0_27, %c0_28] : memref<8x3xf32, #tpu.memory_space<vmem>>, vector<8x3xf32>
      %49 = vector.shape_cast %48 : vector<8x3xf32> to vector<1x8x3xf32>
      %cst_29 = arith.constant dense<0.000000e+00> : vector<1xf32>
      %50 = vector.multi_reduction <add>, %49, %cst_29 [1, 2] : vector<1x8x3xf32> to vector<1xf32>
      %51 = vector.shape_cast %50 : vector<1xf32> to vector<1x1x1xf32>
      %52 = vector.extract %51[0, 0, 0] : f32 from vector<1x1x1xf32>
      %53 = vector.broadcast %52 : f32 to vector<8x128xf32>
      %c0_30 = arith.constant 0 : index
      %c1 = arith.constant 1 : index
      %c0_31 = arith.constant 0 : index
      %c0_32 = arith.constant 0 : index
      %54 = vector.load %arg5[%c0_30, %c1, %c0_31, %c0_32] : memref<1x2x8x128xf32, #tpu.memory_space<vmem>>, vector<1x1x8x128xf32>
      %55 = vector.shape_cast %54 : vector<1x1x8x128xf32> to vector<8x128xf32>
      %56 = vector.shape_cast %53 : vector<8x128xf32> to vector<1x1x8x128xf32>
      tpu.vector_store %arg5[%c0_30, %c1, %c0_31, %c0_32], %56 {strides = array<i32>} : memref<1x2x8x128xf32, #tpu.memory_space<vmem>>, vector<1x1x8x128xf32>,
    } else {
    }
    return
  }
  func.func @transform_0(%arg0: i32, %arg1: i32) -> (i32, i32) {
    %c1_i32 = arith.constant 1 : i32
    %0 = arith.muli %arg0, %c1_i32 : i32
    %1 = arith.addi %0, %arg1 : i32
    %c0_i32 = arith.constant 0 : i32
    %2 = arith.minsi %1, %c0_i32 : i32
    %c0_i32_0 = arith.constant 0 : i32
    %c0_i32_1 = arith.constant 0 : i32
    return %2, %c0_i32_0 : i32, i32
  }
  func.func @transform_1(%arg0: i32, %arg1: i32) -> (i32, i32) {
    %c1_i32 = arith.constant 1 : i32
    %0 = arith.muli %arg0, %c1_i32 : i32
    %1 = arith.addi %0, %arg1 : i32
    %c0_i32 = arith.constant 0 : i32
    %2 = arith.minsi %1, %c0_i32 : i32
    %c0_i32_0 = arith.constant 0 : i32
    %c0_i32_1 = arith.constant 0 : i32
    return %2, %c0_i32_0 : i32, i32
  }
  func.func @transform_2(%arg0: i32, %arg1: i32) -> (i32, i32) {
    %c0_i32 = arith.constant 0 : i32
    %c0_i32_0 = arith.constant 0 : i32
    %c0_i32_1 = arith.constant 0 : i32
    return %c0_i32, %c0_i32_0 : i32, i32
  }
  func.func @transform_3(%arg0: i32, %arg1: i32) -> (i32, i32, i32, i32) {
    %c0_i32 = arith.constant 0 : i32
    %c0_i32_0 = arith.constant 0 : i32
    %c0_i32_1 = arith.constant 0 : i32
    %c0_i32_2 = arith.constant 0 : i32
    return %arg0, %c0_i32, %c0_i32_0, %c0_i32_1 : i32, i32, i32, i32
  }
}

</mosaic_0001>

<llo_original>
// kernel: tpu_custom_call.1
$region0: #{tpu_custom_call.1}
  #allocation0 [shape = 'u32[]', space=smem, size = 0x4, offset = 0x4, fixed_abs, tag = 'smem constant byte address 0x4 - core index']
  #allocation1 [shape = 'u32[144,128]{1,0:T(1,128)}', space=vmem, size = 0x12000, scoped, tag = 'internal scratch']
  #allocation2 [shape = 'f32[8,3]{1,0:T(8,128)}', space=vmem, size = 0x1000, scoped, tag = 'scratch operand']
  #allocation3 [shape = 'f32[8,3]{1,0:T(8,128)}', space=vmem, size = 0x1000, scoped, tag = 'scratch operand']
  %s0 = inlined_call_operand.vmem [shape: f32[8,3], index: 0, kind: input, shape index: {}]
  %s1 = inlined_call_operand.vmem [shape: f32[8,3], index: 1, kind: input, shape index: {}]
  %s2 = inlined_call_operand.vmem [shape: f32[1,3], index: 2, kind: input, shape index: {}]
  %s3 = inlined_call_operand.hbm [shape: f32[2,2,8,128], index: 3, kind: output, shape index: {}]
  %s4 = sld [smem:[#allocation0]]
  $region53: #{tpu_custom_call.1} parent=0
    _
  %s6 = ssub.s32 1, %s4
  %s7 = scalar_select 0, %s6, %s4
  $region1: #{tpu_custom_call.1} parent=0
    #allocation4 [shape = 'u8[16384]{0}', space=vmem, size = 0x4000, scoped, tag = 'output window, operand 0']
    #allocation5 [shape = 's32[2]{0}', space=sflag, size = 0x8, scoped, tag = 'scoped memory for tpu_custom_call.1']
    %8 = vsyncpa [#allocation5], 0
    %s9 = scalar_lea.sflag [#allocation5], 1
    %10 = vsyncpa %s9, 0
    loop: start=0, step=1, limit=4
    $region2: #{tpu_custom_call.1} parent=1 // loop_pre_header
      _
    $region3: #{tpu_custom_call.1} parent=1 // loop_header
      %s12 = sphi 0, %s16
      %p13 = scmp.ge.s32.totalorder %s12, 4
      %s19 = sphi 0, %s31
      %s20 = sphi 0, %s27
      %s21 = sphi 0, %s19
      %s22 = sphi 0, %s20
      %s23 = sphi 0, %s21
      %s24 = sphi 0, %s22
      %s40 = sphi 0, %s42
      %s43 = sphi 0, %s40
      %s44 = sphi 0, %s43
      %s60 = sphi 0, %s44
      %s72 = sphi 0, %s74
      %s75 = sphi 0, %s72
      %s76 = sphi 0, %s75
      %s92 = sphi 0, %s76
      %s96 = sphi 0, %s96
      %s98 = sphi 0, %s96
      %s99 = sphi 0, %s98
      %s113 = sphi 0, %s99
      %s119 = sphi 0, %s121
      %s122 = sphi 0, %s119
      %s123 = sphi 0, %s122
      %s139 = sphi 0, %s123
    $region4: #{tpu_custom_call.1} parent=1 // loop_header_branch
      %15 = sbr.rel (%p13) target = $region8
    $region5: #{tpu_custom_call.1} parent=1 // loop_body
      %s17 = ssub.s32 %s12, 1
      %s18 = ssub.s32 %s12, 2
      %s25 = sadd.s32 1, %s20
      %p26 = scmp.ge.s32.totalorder %s25, 1
      %s27 = scalar_select %p26, 0, %s25
      %s28 = sadd.s32 1, %s19
      %s29 = scalar_select %p26, %s28, %s19
      %p30 = scmp.ge.s32.totalorder %s29, 2
      %s31 = scalar_select %p30, 0, %s29
      %s32 = sadd.s32 %s19, %s20
      %p33 = scmp.lt.s32.totalorder %s32, 0
      %s34 = scalar_select %p33, %s32, 0
      %s35 = sadd.s32 %s31, %s27
      %p36 = scmp.lt.s32.totalorder %s35, 0
      %s37 = scalar_select %p36, %s35, 0
      %s38 = ssub.s32 %s34, %s37
      %p39 = scmp.eq.s32.totalorder %s38, 0
      %s41 = sadd.s32 %s40, 1
      %s42 = scalar_select %p39, %s40, %s41
      %p45 = pneg %p39
      %p46 = scmp.eq.s32.totalorder %s12, 1
      %p47 = por %p45, %p46
      %p48 = scmp.ne.s32.totalorder %s40, %s43
      %p49 = scmp.eq.s32.totalorder %s12, 0
      %p50 = por %p48, %p49
      %p51 = scmp.ne.s32.totalorder %s40, %s43
      %p52 = scmp.eq.s32.totalorder %s17, 1
      %p53 = por %p51, %p52
      %p54 = scmp.ne.s32.totalorder %s43, %s44
      %p55 = scmp.eq.s32.totalorder %s17, 0
      %p56 = por %p54, %p55
      %p57 = scmp.ne.s32.totalorder %s43, %s44
      %p58 = scmp.eq.s32.totalorder %s18, 1
      %p59 = por %p57, %p58
      %p61 = scmp.ne.s32.totalorder %s44, %s60
      %p62 = scmp.eq.s32.totalorder %s18, 0
      %p63 = por %p61, %p62
      %s64 = sadd.s32 %s19, %s20
      %p65 = scmp.lt.s32.totalorder %s64, 0
      %s66 = scalar_select %p65, %s64, 0
      %s67 = sadd.s32 %s31, %s27
      %p68 = scmp.lt.s32.totalorder %s67, 0
      %s69 = scalar_select %p68, %s67, 0
      %s70 = ssub.s32 %s66, %s69
      %p71 = scmp.eq.s32.totalorder %s70, 0
      %s73 = sadd.s32 %s72, 1
      %s74 = scalar_select %p71, %s72, %s73
      %p77 = pneg %p71
      %p78 = scmp.eq.s32.totalorder %s12, 1
      %p79 = por %p77, %p78
      %p80 = scmp.ne.s32.totalorder %s72, %s75
      %p81 = scmp.eq.s32.totalorder %s12, 0
      %p82 = por %p80, %p81
      %p83 = scmp.ne.s32.totalorder %s72, %s75
      %p84 = scmp.eq.s32.totalorder %s17, 1
      %p85 = por %p83, %p84
      %p86 = scmp.ne.s32.totalorder %s75, %s76
      %p87 = scmp.eq.s32.totalorder %s17, 0
      %p88 = por %p86, %p87
      %p89 = scmp.ne.s32.totalorder %s75, %s76
      %p90 = scmp.eq.s32.totalorder %s18, 1
      %p91 = por %p89, %p90
      %p93 = scmp.ne.s32.totalorder %s76, %s92
      %p94 = scmp.eq.s32.totalorder %s18, 0
      %p95 = por %p93, %p94
      %s97 = sadd.s32 %s96, 1
      %p100 = scmp.eq.s32.totalorder %s12, 1
      %p101 = scmp.ne.s32.totalorder %s96, %s98
      %p102 = scmp.eq.s32.totalorder %s12, 0
      %p103 = por %p101, %p102
      %p104 = scmp.ne.s32.totalorder %s96, %s98
      %p105 = scmp.eq.s32.totalorder %s17, 1
      %p106 = por %p104, %p105
      %p107 = scmp.ne.s32.totalorder %s98, %s99
      %p108 = scmp.eq.s32.totalorder %s17, 0
      %p109 = por %p107, %p108
      %p110 = scmp.ne.s32.totalorder %s98, %s99
      %p111 = scmp.eq.s32.totalorder %s18, 1
      %p112 = por %p110, %p111
      %p114 = scmp.ne.s32.totalorder %s99, %s113
      %p115 = scmp.eq.s32.totalorder %s18, 0
      %p116 = por %p114, %p115
      %s117 = ssub.s32 %s19, %s31
      %p118 = scmp.eq.s32.totalorder %s117, 0
      %s120 = sadd.s32 %s119, 1
      %s121 = scalar_select %p118, %s119, %s120
      %p124 = pneg %p118
      %p125 = scmp.eq.s32.totalorder %s12, 1
      %p126 = por %p124, %p125
      %p127 = scmp.ne.s32.totalorder %s119, %s122
      %p128 = scmp.eq.s32.totalorder %s12, 0
      %p129 = por %p127, %p128
      %p130 = scmp.ne.s32.totalorder %s119, %s122
      %p131 = scmp.eq.s32.totalorder %s17, 1
      %p132 = por %p130, %p131
      %p133 = scmp.ne.s32.totalorder %s122, %s123
      %p134 = scmp.eq.s32.totalorder %s17, 0
      %p135 = por %p133, %p134
      %p136 = scmp.ne.s32.totalorder %s122, %s123
      %p137 = scmp.eq.s32.totalorder %s18, 1
      %p138 = por %p136, %p137
      %p140 = scmp.ne.s32.totalorder %s123, %s139
      %p141 = scmp.eq.s32.totalorder %s18, 0
      %p142 = por %p140, %p141
      %p143 = scmp.le.s32.totalorder 1, %s12
      %p144 = scmp.lt.s32.totalorder %s12, 3
      %p145 = pnand %p143, %p144
      %p146 = pneg %p145
      // Predicated region
      $region9: #{tpu_custom_call.1} parent=5 // pred_check
        _
      $region10: #{tpu_custom_call.1} parent=5 // pred_check_branch
        %148 = sbr.rel (%p145) target = $region12
      $region11: #{tpu_custom_call.1} parent=5 // pred_region
        %s149 = ssub.s32 %s12, 1
        // Predicated region
        $region13: #{tpu_custom_call.1} parent=11 // pred_check
          %p150 = pneg %p109
        $region14: #{tpu_custom_call.1} parent=11 // pred_check_branch
          %152 = sbr.rel (%p150) target = $region16
        $region15: #{tpu_custom_call.1} parent=11 // pred_region
          _
        $region16: #{tpu_custom_call.1} parent=11 // pred_fallthru
          _
      $region12: #{tpu_custom_call.1} parent=5 // pred_fallthru
        _
      %p153 = scmp.lt.s32.totalorder %s12, 2
      // Predicated region
      $region17: #{tpu_custom_call.1} parent=5 // pred_check
        %p154 = pneg %p153
      $region18: #{tpu_custom_call.1} parent=5 // pred_check_branch
        %156 = sbr.rel (%p154) target = $region20
      $region19: #{tpu_custom_call.1} parent=5 // pred_region
        // Predicated region
        $region21: #{tpu_custom_call.1} parent=19 // pred_check
          %p157 = pneg %p50
        $region22: #{tpu_custom_call.1} parent=19 // pred_check_branch
          %159 = sbr.rel (%p157) target = $region24
        $region23: #{tpu_custom_call.1} parent=19 // pred_region
          %s160 = sadd.s32 %s19, %s20
          %p161 = scmp.lt.s32.totalorder %s160, 0
          %s162 = scalar_select %p161, %s160, 0
          %p163 = scmp.lt.s32.totalorder %s162, 0
          %s164 = scalar_select %p163, %s162, 0
          %s165 = smul.addr %s164, 8
          %s166 = scalar_lea.vmem %s0, %s165
          %s167 = sadd.s32 %s19, %s20
          %p168 = scmp.lt.s32.totalorder %s167, 0
          %s169 = scalar_select %p168, %s167, 0
        $region24: #{tpu_custom_call.1} parent=19 // pred_fallthru
          _
        // Predicated region
        $region25: #{tpu_custom_call.1} parent=19 // pred_check
          %p170 = pneg %p82
        $region26: #{tpu_custom_call.1} parent=19 // pred_check_branch
          %172 = sbr.rel (%p170) target = $region28
        $region27: #{tpu_custom_call.1} parent=19 // pred_region
          %s173 = sadd.s32 %s19, %s20
          %p174 = scmp.lt.s32.totalorder %s173, 0
          %s175 = scalar_select %p174, %s173, 0
          %p176 = scmp.lt.s32.totalorder %s175, 0
          %s177 = scalar_select %p176, %s175, 0
          %s178 = smul.addr %s177, 8
          %s179 = scalar_lea.vmem %s1, %s178
          %s180 = sadd.s32 %s19, %s20
          %p181 = scmp.lt.s32.totalorder %s180, 0
          %s182 = scalar_select %p181, %s180, 0
        $region28: #{tpu_custom_call.1} parent=19 // pred_fallthru
          _
      $region20: #{tpu_custom_call.1} parent=5 // pred_fallthru
        _
      %p183 = scmp.le.s32.totalorder 1, %s12
      %p184 = scmp.lt.s32.totalorder %s12, 3
      %p185 = pnand %p183, %p184
      %p186 = pneg %p185
      // Predicated region
      $region29: #{tpu_custom_call.1} parent=5 // pred_check
        _
      $region30: #{tpu_custom_call.1} parent=5 // pred_check_branch
        %188 = sbr.rel (%p185) target = $region32
      $region31: #{tpu_custom_call.1} parent=5 // pred_region
        %s189 = ssub.s32 %s12, 1
        %s190 = sadd.s32 %s21, %s22
        %p191 = scmp.lt.s32.totalorder %s190, 0
        %s192 = scalar_select %p191, %s190, 0
        %p193 = scmp.lt.s32.totalorder %s192, 0
        %s194 = scalar_select %p193, %s192, 0
        %s195 = smul.addr %s194, 8
        %s196 = scalar_lea.vmem %s0, %s195
        %p197 = pneg %p56
        %p198 = pneg %p53
        %s199 = sadd.s32 %s21, %s22
        %p200 = scmp.lt.s32.totalorder %s199, 0
        %s201 = scalar_select %p200, %s199, 0
        %p202 = scmp.lt.s32.totalorder %s201, 0
        %s203 = scalar_select %p202, %s201, 0
        %s204 = smul.addr %s203, 8
        %s205 = scalar_lea.vmem %s1, %s204
        %p206 = pneg %p88
        %p207 = pneg %p85
        %p208 = pneg %p109
        %p209 = pneg %p106
        %p210 = pneg %p135
        %p211 = pneg %p132
        %s212 = sand.u32 %s122, 1
        %s213 = scalar_lea.sflag [#allocation5], %s212
        %s214 = sand.u32 %s122, 1
        %s215 = smul.addr %s214, 16
        %s216 = scalar_lea.vmem [#allocation4], %s215
        %s217 = sadd.s32 %s21, %s22
        %p218 = scmp.lt.s32.totalorder %s217, 0
        %s219 = scalar_select %p218, %s217, 0
        %p220 = scmp.lt.s32.totalorder %s219, 0
        %s221 = scalar_select %p220, %s219, 0
        %s222 = smul.addr %s221, 8
        %s223 = scalar_lea.vmem %s0, %s222
        %s224 = sadd.s32 %s21, %s22
        %p225 = scmp.lt.s32.totalorder %s224, 0
        %s226 = scalar_select %p225, %s224, 0
        %s227 = sadd.s32 %s21, %s22
        %p228 = scmp.lt.s32.totalorder %s227, 0
        %s229 = scalar_select %p228, %s227, 0
        %p230 = scmp.lt.s32.totalorder %s229, 0
        %s231 = scalar_select %p230, %s229, 0
        %s232 = smul.addr %s231, 8
        %s233 = scalar_lea.vmem %s1, %s232
        %s234 = sadd.s32 %s21, %s22
        %p235 = scmp.lt.s32.totalorder %s234, 0
        %s236 = scalar_select %p235, %s234, 0
        %p237 = scmp.eq.s32.totalorder %s22, 0
        // Predicated region
        $region33: #{tpu_custom_call.1} parent=31 // pred_check
          %p238 = pneg %p237
        $region34: #{tpu_custom_call.1} parent=31 // pred_check_branch
          %240 = sbr.rel (%p238) target = $region36
        $region35: #{tpu_custom_call.1} parent=31 // pred_region
          %vm241 = vcmask 23552
          %242 = vst.msk [vmem:[#allocation2] sm:$0xff] %vm241, 0.0
          %243 = vst.msk [vmem:[#allocation3] sm:$0xff] %vm241, 0.0
        $region36: #{tpu_custom_call.1} parent=31 // pred_fallthru
          _
        %s244 = sadd.s32 %s21, %s22
        %v245 = vlaneseq
        %v246 = vshrl.u32 %v245, 7
        %s247 = smul.u32 %s244, 8
        %v248 = vstv %s247
        %v249 = vadd.s32 %v246, %v248
        %vm250 = vcmp.lt.s32.totalorder %v249, 8
        %v251 = vld [vmem:[%s2] sm:$0x1]
        %v252 = vld [vmem:[#allocation2] sm:$0xff]
        %v253 = vld [vmem:[%s223] sm:$0xff]
        %v254 = vsel %vm250, 1, 0
        %vm255 = vcmp.eq.s32.totalorder %v254, 1
        %v256 = vsel %vm255, %v253, 0.0
        %v258 = vlaneseq
        %v259 = vshrl.u32 %v258, 7
        %v260 = vsub.s32 0, %v259
        %v261 = vrot.slane %v251, %v260
        %v263 = vmul.f32 %v256, %v261
        %v264 = vadd.f32 %v263, 0.0
        %v265 = vadd.f32 %v252, %v264
        %vm266 = vcmask 23552
        %267 = vst.msk [vmem:[#allocation2] sm:$0xff] %vm266, %v265
        %v268 = vld [vmem:[#allocation3] sm:$0xff]
        %v269 = vld [vmem:[%s233] sm:$0xff]
        %v270 = vsel %vm255, %v269, 0.0
        %v271 = vmul.f32 %v270, %v261
        %v272 = vadd.f32 %v271, 0.0
        %v273 = vadd.f32 %v268, %v272
        %274 = vst.msk [vmem:[#allocation3] sm:$0xff] %vm266, %v273
        // Predicated region
        $region37: #{tpu_custom_call.1} parent=31 // pred_check
          %p275 = pneg %p237
        $region38: #{tpu_custom_call.1} parent=31 // pred_check_branch
          %277 = sbr.rel (%p275) target = $region40
        $region39: #{tpu_custom_call.1} parent=31 // pred_region
          %v278 = vld [vmem:[#allocation2] sm:$0xff]
          %v279 = vsel %vm266, %v278, 0.0
          %280 = vadd.xlane.f32.xlu0 %v279
          %v281 = vpop.xlane.xlu0 %280
          %v282 = vrot.slane %v281, 4
          %v283 = vadd.f32 %v281, %v282
          %v284 = vrot.slane %v283, 2
          %v285 = vadd.f32 %v283, %v284
          %v286 = vrot.slane %v285, 1
          %v287 = vadd.f32 %v285, %v286
          %s288 = vtos %v287
          %v289 = vstv %s288
          %290 = vst [vmem:[%s216] sm:$0xff] %v289
          %v291 = vld [vmem:[#allocation3] sm:$0xff]
          %v292 = vsel %vm266, %v291, 0.0
          %293 = vadd.xlane.f32.xlu0 %v292
          %v294 = vpop.xlane.xlu0 %293
          %v295 = vrot.slane %v294, 4
          %v296 = vadd.f32 %v294, %v295
          %v297 = vrot.slane %v296, 2
          %v298 = vadd.f32 %v296, %v297
          %v299 = vrot.slane %v298, 1
          %v300 = vadd.f32 %v298, %v299
          %s301 = vtos %v300
          %v302 = vstv %s301
          %s303 = scalar_lea.vmem %s216, 8 [#allocation4]
          %304 = vst [vmem:[%s303] sm:$0xff] %v302
        $region40: #{tpu_custom_call.1} parent=31 // pred_fallthru
          _
        %s305 = sand.u32 %s122, 1
        %s306 = scalar_lea.sflag [#allocation5], %s305
        %s307 = sand.u32 %s122, 1
        %s308 = smul.addr %s307, 16
        %s309 = scalar_lea.vmem [#allocation4], %s308
        // Predicated region
        $region41: #{tpu_custom_call.1} parent=31 // pred_check
          %p310 = pneg %p132
        $region42: #{tpu_custom_call.1} parent=31 // pred_check_branch
          %312 = sbr.rel (%p310) target = $region44
        $region43: #{tpu_custom_call.1} parent=31 // pred_region
          %s314 = ssub.s32 256, 256
          %315 = vsyncadd %s306, %s314
          %s316 = smul.addr %s21, 2
          %s317 = smul.addr %s316, 128
          %s318 = scalar_lea.hbm %s3, %s317
          %s319 = sshll.u32 %s309, 4
          %s320 = int_to_ptr.vmem [resolvable:$true] %s319
          %325 = dma.vmem_to_hbm [thread:$0]  %s320, 256, %s318, %s306, 128, 128, 8
        $region44: #{tpu_custom_call.1} parent=31 // pred_fallthru
          _
      $region32: #{tpu_custom_call.1} parent=5 // pred_fallthru
        _
      %p326 = scmp.le.s32.totalorder 2, %s12
      // Predicated region
      $region45: #{tpu_custom_call.1} parent=5 // pred_check
        %p327 = pneg %p326
      $region46: #{tpu_custom_call.1} parent=5 // pred_check_branch
        %329 = sbr.rel (%p327) target = $region48
      $region47: #{tpu_custom_call.1} parent=5 // pred_region
        %s330 = ssub.s32 %s12, 2
        // Predicated region
        $region49: #{tpu_custom_call.1} parent=47 // pred_check
          %p331 = pneg %p138
        $region50: #{tpu_custom_call.1} parent=47 // pred_check_branch
          %333 = sbr.rel (%p331) target = $region52
        $region51: #{tpu_custom_call.1} parent=47 // pred_region
          %s334 = sand.u32 %s123, 1
          %s335 = scalar_lea.sflag [#allocation5], %s334
          %s336 = sand.u32 %s123, 1
          %s337 = smul.addr %s336, 16
          %s338 = scalar_lea.vmem [#allocation4], %s337
          %339 = dma.done %s335, 256
        $region52: #{tpu_custom_call.1} parent=47 // pred_fallthru
          _
      $region48: #{tpu_custom_call.1} parent=5 // pred_fallthru
        _
    $region6: #{tpu_custom_call.1} parent=1 // loop_footer
      %s16 = sadd.s32 1, %s12
    $region7: #{tpu_custom_call.1} parent=1 // loop_footer_branch
      %11 = sbr.rel target = $region3
    $region8: #{tpu_custom_call.1} parent=1 // loop_exit
      _
    %340 = vsyncpa [#allocation5], 1
    %s341 = scalar_lea.sflag [#allocation5], 1
    %342 = vsyncpa %s341, 1

</llo_original>
